<compile_context>
chip_gen: v5e
topology: v5e:2x2
jax: 0.10.0
libtpu: 0.0.40
codegen_flags: <defaults>
</compile_context>

<pallas_src>
import functools

import jax
import jax.numpy as jnp
from jax.experimental import pallas as pl
from jax.experimental.pallas import tpu as pltpu


_LANE = 128
# Per-input, per-step VMEM tile target.  2 inputs x 2 pipeline buffers x 4 MiB
# = 16 MiB, comfortably inside every generation's VMEM while large enough that
# the fixed per-grid-step overhead is <10% of the tile's HBM drain time even
# at v7x's 3.2 TB/s.
_TARGET_TILE_BYTES = 4 * 1024 * 1024
_VMEM_LIMIT_BYTES = 48 * 1024 * 1024


def _cdiv(a, b):
    return -(-a // b)


def _sublane_multiple(itemsize):
    # f32 -> 8, bf16/f16 -> 16, int8/fp8 -> 32 sublane pack.
    return {4: 8, 2: 16, 1: 32}.get(itemsize, 8)


def _pow_terms(pred, targ, p_exp):
    if p_exp == 1:
        return pred + targ
    if p_exp == 2:
        return pred * pred + targ * targ
    return pred ** p_exp + targ ** p_exp


def _dice_kernel(p_ref, t_ref, num_ref, den_ref, *, p_exp, rows, rows_block,
                 num_k, full_blocks, need_mask):
    """Lane-dense dice partial sums.

    Inputs are (bb, rows_block, 128) tiles of a (B, rows, 128) view;
    grid = (b_blocks, split, num_k) with the reduction axis innermost
    ('arbitrary').  Outputs are (bb, 1, 1, 128) per-lane partials of shape
    (B, split, 1, 128), accumulated in place across the reduction axis; the
    final (cheap) cross-lane / cross-split reduce happens in the wrapper.
    """
    k = pl.program_id(2)

    @pl.when(k == 0)
    def _():
        num_ref[...] = jnp.zeros_like(num_ref)
        den_ref[...] = jnp.zeros_like(den_ref)

    def terms():
        pred = p_ref[...].astype(jnp.float32)   # (bb, rows_block, 128)
        targ = t_ref[...].astype(jnp.float32)
        return pred * targ, _pow_terms(pred, targ, p_exp)

    def accum(num_t, den_t):
        # Reduce only over the row (sublane) axis here; batch stays per-row.
        num_ref[...] += jnp.sum(num_t, axis=1)[:, None, None, :]
        den_ref[...] += jnp.sum(den_t, axis=1)[:, None, None, :]

    if not need_mask:
        accum(*terms())
    else:
        s = pl.program_id(1)
        g = s * num_k + k  # global row-block index (unclamped; may be phantom)

        # Fast path: fully valid tiles pay no masking cost.
        @pl.when(g < full_blocks)
        def _():
            accum(*terms())

        # Edge path: ragged last row block and/or phantom block of the 2-way
        # split.  Mask the *terms* (not the inputs), so zero-padding is
        # sum-neutral for any p and never propagates NaN/Inf from padding.
        @pl.when(g >= full_blocks)
        def _():
            num_t, den_t = terms()
            valid = rows - g * rows_block          # <= 0 for phantom blocks
            row_ids = jax.lax.broadcasted_iota(jnp.int32, num_t.shape, 1)
            keep = row_ids < valid
            accum(jnp.where(keep, num_t, 0.0), jnp.where(keep, den_t, 0.0))


def _dice_sums_pallas(pred3, targ3, p_exp, block_rows=None, block_batch=None):
    """pred3/targ3: (B, rows, 128) views. Returns per-batch (num, den) f32 sums."""
    B, rows, _ = pred3.shape
    itemsize = pred3.dtype.itemsize
    sub = _sublane_multiple(itemsize)
    # Tile budget expressed in rows of 128 lanes at this dtype.
    tile_rows = max(sub, _TARGET_TILE_BYTES // (_LANE * itemsize))

    if rows >= tile_rows:
        rows_block = max(sub, (tile_rows // sub) * sub)
        bb = 1
    else:
        rows_block = rows                      # full dim: no (8,128) constraint
        bb = max(1, min(B, tile_rows // max(rows, 1)))

    # Testing / tuning overrides (block_rows should be a multiple of the
    # dtype's sublane pack, or >= rows).
    if block_rows is not None:
        rows_block = min(block_rows, rows)
    if block_batch is not None:
        bb = max(1, min(block_batch, B))

    k_total = _cdiv(rows, rows_block)
    b_blocks = _cdiv(B, bb)
    # v7x has 2 TensorCores: when the batch-block count is 1 or odd, split the
    # reduction axis into two 'parallel' halves so both cores get work.
    split = 2 if (k_total >= 2 and b_blocks % 2 == 1) else 1
    num_k = _cdiv(k_total, split)
    full_blocks = rows // rows_block
    phantom = split * num_k != k_total
    need_mask = (rows % rows_block != 0) or phantom

    def in_map(b, s, k):
        g = s * num_k + k
        if phantom:
            # Phantom steps re-read the last real block; fully masked in-kernel.
            g = jnp.minimum(g, k_total - 1)
        return (b, g, 0)

    kernel = functools.partial(
        _dice_kernel, p_exp=p_exp, rows=rows, rows_block=rows_block,
        num_k=num_k, full_blocks=full_blocks, need_mask=need_mask)

    num_p, den_p = pl.pallas_call(
        kernel,
        out_shape=(
            jax.ShapeDtypeStruct((B, split, 1, _LANE), jnp.float32),
            jax.ShapeDtypeStruct((B, split, 1, _LANE), jnp.float32),
        ),
        grid_spec=pltpu.PrefetchScalarGridSpec(
            num_scalar_prefetch=0,
            grid=(b_blocks, split, num_k),
            in_specs=[
                pl.BlockSpec((bb, rows_block, _LANE), in_map),
                pl.BlockSpec((bb, rows_block, _LANE), in_map),
            ],
            out_specs=(
                pl.BlockSpec((bb, 1, 1, _LANE), lambda b, s, k: (b, s, 0, 0)),
                pl.BlockSpec((bb, 1, 1, _LANE), lambda b, s, k: (b, s, 0, 0)),
            ),
        ),
        compiler_params=pltpu.CompilerParams(
            dimension_semantics=("parallel", "parallel", "arbitrary"),
            vmem_limit_bytes=_VMEM_LIMIT_BYTES),
    )(pred3, targ3)

    return jnp.sum(num_p, axis=(1, 2, 3)), jnp.sum(den_p, axis=(1, 2, 3))


def binary_dice_loss(predict, target, smooth=1.0, p=2, reduction="mean",
                     block_rows=None, block_batch=None):
    assert predict.shape[0] == target.shape[0], \
        "predict & target batch size don't match"
    B = predict.shape[0]
    predict = predict.reshape(B, -1)
    target = target.reshape(B, -1)
    N = predict.shape[1]

    n_main = (N // _LANE) * _LANE
    rows = n_main // _LANE

    num = jnp.zeros((B,), jnp.float32)
    den = jnp.zeros((B,), jnp.float32)

    if rows > 0:
        if n_main == N:
            pm, tg = predict, target               # aligned: single HBM read
        else:
            # Non-multiple-of-128 N: route 99%+ of the data through the
            # lane-dense kernel.  The slice is an extra XLA copy (fallback only).
            pm, tg = predict[:, :n_main], target[:, :n_main]
        num_k, den_k = _dice_sums_pallas(
            pm.reshape(B, rows, _LANE), tg.reshape(B, rows, _LANE),
            p, block_rows, block_batch)
        num = num + num_k
        den = den + den_k

    if n_main < N:
        # <=127-element ragged tail per row: exact, plain jnp.
        pt = predict[:, n_main:].astype(jnp.float32)
        tt = target[:, n_main:].astype(jnp.float32)
        num = num + jnp.sum(pt * tt, axis=1)
        den = den + jnp.sum(_pow_terms(pt, tt, p), axis=1)

    num = num + smooth
    den = den + smooth
    loss = 1.0 - num / den

    if reduction == "mean":
        return jnp.mean(loss)
    elif reduction == "sum":
        return jnp.sum(loss)
    elif reduction == "none":
        return loss
    else:
        raise Exception("Unexpected reduction {}".format(reduction))


if __name__ == "__main__":
    key = jax.random.PRNGKey(0)
    k1, k2 = jax.random.split(key)

    def ref_loss(predict, target, smooth=1.0, p=2, reduction="mean"):
        b = predict.shape[0]
        pf = predict.reshape(b, -1).astype(jnp.float32)
        tf = target.reshape(b, -1).astype(jnp.float32)
        num = jnp.sum(pf * tf, axis=1) + smooth
        den = jnp.sum(pf ** p + tf ** p, axis=1) + smooth
        loss = 1.0 - num / den
        if reduction == "mean":
            return jnp.mean(loss)
        if reduction == "sum":
            return jnp.sum(loss)
        return loss

    # 1) Segmentation-like NCHW shape, N multiple of 128 (single-read path).
    B, C, H, W = 2, 4, 16, 16
    predict = jax.nn.sigmoid(jax.random.normal(k1, (B, C, H, W), dtype=jnp.float32))
    target = (jax.random.uniform(k2, (B, C, H, W)) > 0.5).astype(jnp.float32)
    loss = jax.block_until_ready(binary_dice_loss(predict, target))
    assert jnp.allclose(loss, ref_loss(predict, target), atol=1e-5, rtol=1e-5), loss

    # 2) bf16 inputs (halved HBM traffic; kernel accumulates in f32).
    pb, tb = predict.astype(jnp.bfloat16), target.astype(jnp.bfloat16)
    lb = jax.block_until_ready(binary_dice_loss(pb, tb))
    assert jnp.allclose(lb, ref_loss(pb, tb), atol=1e-5, rtol=1e-5), lb

    # 3) N not a multiple of 128: kernel on first 768 cols + jnp tail.
    H2, W2 = 15, 13  # N = 4*15*13 = 780
    p2 = jax.nn.sigmoid(jax.random.normal(k1, (B, C, H2, W2), dtype=jnp.float32))
    t2 = (jax.random.uniform(k2, (B, C, H2, W2)) > 0.5).astype(jnp.float32)
    l2 = jax.block_until_ready(binary_dice_loss(p2, t2))
    assert jnp.allclose(l2, ref_loss(p2, t2), atol=1e-5, rtol=1e-5), l2

    # 4) Forced small tiles: multi-block reduction, ragged last row block, the
    #    2-way parallel split (phantom block masked), p=1 and reduction='none'.
    p3 = jax.nn.sigmoid(jax.random.normal(k1, (2, 1, 40, 128), dtype=jnp.float32))
    t3 = (jax.random.uniform(k2, (2, 1, 40, 128)) > 0.5).astype(jnp.float32)
    l3 = jax.block_until_ready(binary_dice_loss(
        p3, t3, p=1, reduction="none", block_rows=16, block_batch=2))
    assert jnp.allclose(l3, ref_loss(p3, t3, p=1, reduction="none"),
                        atol=1e-5, rtol=1e-5), l3

    print("KERNEL_OK")
</pallas_src>

<mosaic_0001>
module attributes {stable_mosaic.version = 11 : i64} {
  func.func @_dice_kernel(%arg0: i32, %arg1: i32, %arg2: i32, %arg3: memref<2x8x128xf32, #tpu.memory_space<vmem>>, %arg4: memref<2x8x128xf32, #tpu.memory_space<vmem>>, %arg5: memref<2x1x1x128xf32, #tpu.memory_space<vmem>>, %arg6: memref<2x1x1x128xf32, #tpu.memory_space<vmem>>) attributes {dimension_semantics = [#tpu.dimension_semantics<parallel>, #tpu.dimension_semantics<parallel>, #tpu.dimension_semantics<arbitrary>], iteration_bounds = array<i64: 1, 1, 1>, scalar_prefetch = 0 : i64, scratch_operands = 0 : i64, tpu.core_type = #tpu.core_type<tc>, window_params = [{transform_indices = @transform_0, window_bounds = array<i64: 2, 8, 128>}, {transform_indices = @transform_1, window_bounds = array<i64: 2, 8, 128>}, {transform_indices = @transform_2, window_bounds = array<i64: 2, 1, 1, 128>}, {transform_indices = @transform_3, window_bounds = array<i64: 2, 1, 1, 128>}]} {
    %c0_i32 = arith.constant 0 : i32
    %0 = arith.cmpi eq, %arg2, %c0_i32 : i32
    %1 = arith.extui %0 : i1 to i32
    %c0_i32_0 = arith.constant 0 : i32
    %2 = arith.cmpi ne, %1, %c0_i32_0 : i32
    scf.if %2 {
      %cst_23 = arith.constant 0.000000e+00 : f32
      %19 = vector.broadcast %cst_23 : f32 to vector<2x1x1x128xf32>
      %c0_24 = arith.constant 0 : index
      %c0_25 = arith.constant 0 : index
      %c0_26 = arith.constant 0 : index
      %c0_27 = arith.constant 0 : index
      %20 = vector.load %arg5[%c0_24, %c0_25, %c0_26, %c0_27] : memref<2x1x1x128xf32, #tpu.memory_space<vmem>>, vector<2x1x1x128xf32>
      tpu.vector_store %arg5[%c0_24, %c0_25, %c0_26, %c0_27], %19 {strides = array<i32>} : memref<2x1x1x128xf32, #tpu.memory_space<vmem>>, vector<2x1x1x128xf32>,
      %cst_28 = arith.constant 0.000000e+00 : f32
      %21 = vector.broadcast %cst_28 : f32 to vector<2x1x1x128xf32>
      %c0_29 = arith.constant 0 : index
      %c0_30 = arith.constant 0 : index
      %c0_31 = arith.constant 0 : index
      %c0_32 = arith.constant 0 : index
      %22 = vector.load %arg6[%c0_29, %c0_30, %c0_31, %c0_32] : memref<2x1x1x128xf32, #tpu.memory_space<vmem>>, vector<2x1x1x128xf32>
      tpu.vector_store %arg6[%c0_29, %c0_30, %c0_31, %c0_32], %21 {strides = array<i32>} : memref<2x1x1x128xf32, #tpu.memory_space<vmem>>, vector<2x1x1x128xf32>,
    } else {
    }
    %c0 = arith.constant 0 : index
    %c0_1 = arith.constant 0 : index
    %c0_2 = arith.constant 0 : index
    %3 = vector.load %arg3[%c0, %c0_1, %c0_2] : memref<2x8x128xf32, #tpu.memory_space<vmem>>, vector<2x8x128xf32>
    %c0_3 = arith.constant 0 : index
    %c0_4 = arith.constant 0 : index
    %c0_5 = arith.constant 0 : index
    %4 = vector.load %arg4[%c0_3, %c0_4, %c0_5] : memref<2x8x128xf32, #tpu.memory_space<vmem>>, vector<2x8x128xf32>
    %5 = arith.mulf %3, %4 : vector<2x8x128xf32>
    %6 = arith.mulf %3, %3 : vector<2x8x128xf32>
    %7 = arith.mulf %4, %4 : vector<2x8x128xf32>
    %8 = arith.addf %6, %7 : vector<2x8x128xf32>
    %c0_6 = arith.constant 0 : index
    %c0_7 = arith.constant 0 : index
    %c0_8 = arith.constant 0 : index
    %c0_9 = arith.constant 0 : index
    %9 = vector.load %arg5[%c0_6, %c0_7, %c0_8, %c0_9] : memref<2x1x1x128xf32, #tpu.memory_space<vmem>>, vector<2x1x1x128xf32>
    %cst = arith.constant dense<0.000000e+00> : vector<2x128xf32>
    %10 = vector.multi_reduction <add>, %5, %cst [1] : vector<2x8x128xf32> to vector<2x128xf32>
    %11 = vector.shape_cast %10 : vector<2x128xf32> to vector<2x1x1x128xf32>
    %12 = arith.addf %9, %11 : vector<2x1x1x128xf32>
    %c0_10 = arith.constant 0 : index
    %c0_11 = arith.constant 0 : index
    %c0_12 = arith.constant 0 : index
    %c0_13 = arith.constant 0 : index
    %13 = vector.load %arg5[%c0_10, %c0_11, %c0_12, %c0_13] : memref<2x1x1x128xf32, #tpu.memory_space<vmem>>, vector<2x1x1x128xf32>
    tpu.vector_store %arg5[%c0_10, %c0_11, %c0_12, %c0_13], %12 {strides = array<i32>} : memref<2x1x1x128xf32, #tpu.memory_space<vmem>>, vector<2x1x1x128xf32>,
    %c0_14 = arith.constant 0 : index
    %c0_15 = arith.constant 0 : index
    %c0_16 = arith.constant 0 : index
    %c0_17 = arith.constant 0 : index
    %14 = vector.load %arg6[%c0_14, %c0_15, %c0_16, %c0_17] : memref<2x1x1x128xf32, #tpu.memory_space<vmem>>, vector<2x1x1x128xf32>
    %cst_18 = arith.constant dense<0.000000e+00> : vector<2x128xf32>
    %15 = vector.multi_reduction <add>, %8, %cst_18 [1] : vector<2x8x128xf32> to vector<2x128xf32>
    %16 = vector.shape_cast %15 : vector<2x128xf32> to vector<2x1x1x128xf32>
    %17 = arith.addf %14, %16 : vector<2x1x1x128xf32>
    %c0_19 = arith.constant 0 : index
    %c0_20 = arith.constant 0 : index
    %c0_21 = arith.constant 0 : index
    %c0_22 = arith.constant 0 : index
    %18 = vector.load %arg6[%c0_19, %c0_20, %c0_21, %c0_22] : memref<2x1x1x128xf32, #tpu.memory_space<vmem>>, vector<2x1x1x128xf32>
    tpu.vector_store %arg6[%c0_19, %c0_20, %c0_21, %c0_22], %17 {strides = array<i32>} : memref<2x1x1x128xf32, #tpu.memory_space<vmem>>, vector<2x1x1x128xf32>,
    return
  }
  func.func @transform_0(%arg0: i32, %arg1: i32, %arg2: i32) -> (i32, i32, i32) {
    %c1_i32 = arith.constant 1 : i32
    %0 = arith.muli %arg1, %c1_i32 : i32
    %1 = arith.addi %0, %arg2 : i32
    %c0_i32 = arith.constant 0 : i32
    %c0_i32_0 = arith.constant 0 : i32
    return %arg0, %1, %c0_i32 : i32, i32, i32
  }
  func.func @transform_1(%arg0: i32, %arg1: i32, %arg2: i32) -> (i32, i32, i32) {
    %c1_i32 = arith.constant 1 : i32
    %0 = arith.muli %arg1, %c1_i32 : i32
    %1 = arith.addi %0, %arg2 : i32
    %c0_i32 = arith.constant 0 : i32
    %c0_i32_0 = arith.constant 0 : i32
    return %arg0, %1, %c0_i32 : i32, i32, i32
  }
  func.func @transform_2(%arg0: i32, %arg1: i32, %arg2: i32) -> (i32, i32, i32, i32) {
    %c0_i32 = arith.constant 0 : i32
    %c0_i32_0 = arith.constant 0 : i32
    %c0_i32_1 = arith.constant 0 : i32
    return %arg0, %arg1, %c0_i32, %c0_i32_0 : i32, i32, i32, i32
  }
  func.func @transform_3(%arg0: i32, %arg1: i32, %arg2: i32) -> (i32, i32, i32, i32) {
    %c0_i32 = arith.constant 0 : i32
    %c0_i32_0 = arith.constant 0 : i32
    %c0_i32_1 = arith.constant 0 : i32
    return %arg0, %arg1, %c0_i32, %c0_i32_0 : i32, i32, i32, i32
  }
}

</mosaic_0001>

<llo_original>
// kernel: tpu_custom_call.1
$region0: #{tpu_custom_call.1}
  #allocation0 [shape = 'u32[]', space=smem, size = 0x4, offset = 0x4, fixed_abs, tag = 'smem constant byte address 0x4 - core index']
  #allocation1 [shape = 'u32[72,128]{1,0:T(1,128)}', space=vmem, size = 0x9000, scoped, tag = 'internal scratch']
  %s0 = inlined_call_operand.hbm [shape: f32[2,8,128], index: 0, kind: input, shape index: {}]
  %s1 = inlined_call_operand.hbm [shape: f32[2,8,128], index: 1, kind: input, shape index: {}]
  %s2 = inlined_call_operand.hbm [shape: f32[2,1,1,128], index: 2, kind: output, shape index: {0}]
  %s3 = inlined_call_operand.hbm [shape: f32[2,1,1,128], index: 3, kind: output, shape index: {1}]
  %4 = xla_tuple %s2, %s3
  %s5 = sld [smem:[#allocation0]]
  $region38: #{tpu_custom_call.1} parent=0
    _
  %s7 = ssub.s32 1, %s5
  %s8 = scalar_select 0, %s7, %s5
  $region1: #{tpu_custom_call.1} parent=0
    #allocation2 [shape = 'u8[8192]{0}', space=vmem, size = 0x2000, scoped, tag = 'input window, operand 0, single buffered']
    #allocation3 [shape = 's32[1]{0}', space=sflag, size = 0x4, scoped, tag = 'scoped memory for tpu_custom_call.1']
    #allocation4 [shape = 's32[1]{0}', space=sflag, size = 0x4, scoped, tag = 'scoped memory for tpu_custom_call.1']
    #allocation5 [shape = 'u8[8192]{0}', space=vmem, size = 0x2000, scoped, tag = 'input window, operand 1, single buffered']
    #allocation6 [shape = 's32[1]{0}', space=sflag, size = 0x4, scoped, tag = 'scoped memory for tpu_custom_call.1']
    #allocation7 [shape = 'u8[1024]{0}', space=vmem, size = 0x400, scoped, tag = 'output window, operand 0, single buffered']
    #allocation8 [shape = 'u8[1024]{0}', space=vmem, size = 0x400, scoped, tag = 'output window, operand 1, single buffered']
    #allocation9 [shape = 's32[1]{0}', space=sflag, size = 0x4, scoped, tag = 'scoped memory for tpu_custom_call.1']
    %9 = vsyncpa [#allocation3], 0
    %10 = vsyncpa [#allocation6], 0
    %11 = vsyncpa [#allocation4], 0
    %12 = vsyncpa [#allocation9], 0
    // Predicated region
    $region2: #{tpu_custom_call.1} parent=1 // pred_check
      _
    $region3: #{tpu_custom_call.1} parent=1 // pred_check_branch
      %14 = sbr.rel (0) target = $region5
    $region4: #{tpu_custom_call.1} parent=1 // pred_region
      %s15 = sadd.s32 0, 0
      %17 = vsyncadd [#allocation3], 0
      %s18 = smul.addr %s15, 8
      %s19 = scalar_lea.hbm %s0, %s18
      %s20 = sshll.u32 %s19, 4
      %s21 = int_to_ptr.hbm [resolvable:$true] %s20
      %s22 = sshll.u32 [#allocation2], 4
      %s23 = int_to_ptr.vmem [resolvable:$true] %s22
      %28 = dma.hbm_to_vmem [thread:$0]  %s21, 256, %s23, [#allocation3], 128, 128, 8
    $region5: #{tpu_custom_call.1} parent=1 // pred_fallthru
      _
    // Predicated region
    $region6: #{tpu_custom_call.1} parent=1 // pred_check
      _
    $region7: #{tpu_custom_call.1} parent=1 // pred_check_branch
      %30 = sbr.rel (0) target = $region9
    $region8: #{tpu_custom_call.1} parent=1 // pred_region
      %s31 = sadd.s32 0, 0
      %33 = vsyncadd [#allocation6], 0
      %s34 = smul.addr %s31, 8
      %s35 = scalar_lea.hbm %s1, %s34
      %s36 = sshll.u32 %s35, 4
      %s37 = int_to_ptr.hbm [resolvable:$true] %s36
      %s38 = sshll.u32 [#allocation5], 4
      %s39 = int_to_ptr.vmem [resolvable:$true] %s38
      %44 = dma.hbm_to_vmem [thread:$0]  %s37, 256, %s39, [#allocation6], 128, 128, 8
    $region9: #{tpu_custom_call.1} parent=1 // pred_fallthru
      _
    // Predicated region
    $region10: #{tpu_custom_call.1} parent=1 // pred_check
      _
    $region11: #{tpu_custom_call.1} parent=1 // pred_check_branch
      %46 = sbr.rel (0) target = $region13
    $region12: #{tpu_custom_call.1} parent=1 // pred_region
      %48 = dma.done [#allocation3], 256
    $region13: #{tpu_custom_call.1} parent=1 // pred_fallthru
      _
    // Predicated region
    $region14: #{tpu_custom_call.1} parent=1 // pred_check
      _
    $region15: #{tpu_custom_call.1} parent=1 // pred_check_branch
      %50 = sbr.rel (0) target = $region17
    $region16: #{tpu_custom_call.1} parent=1 // pred_region
      %52 = dma.done [#allocation6], 256
    $region17: #{tpu_custom_call.1} parent=1 // pred_fallthru
      _
    %s53 = sadd.s32 0, 0
    %s54 = sadd.s32 0, 0
    %p55 = scmp.eq.s32.totalorder 0, 0
    // Predicated region
    $region18: #{tpu_custom_call.1} parent=1 // pred_check
      %p56 = pneg %p55
    $region19: #{tpu_custom_call.1} parent=1 // pred_check_branch
      %58 = sbr.rel (%p56) target = $region21
    $region20: #{tpu_custom_call.1} parent=1 // pred_region
      %59 = vst [vmem:[#allocation7] sm:$0x1] 0.0
      %60 = vst [vmem:[#allocation7 + $0x1] sm:$0x1] 0.0
      %61 = vst [vmem:[#allocation8] sm:$0x1] 0.0
      %62 = vst [vmem:[#allocation8 + $0x1] sm:$0x1] 0.0
    $region21: #{tpu_custom_call.1} parent=1 // pred_fallthru
      _
    %v63 = vld [vmem:[#allocation2] sm:$0xff]
    %v64 = vld [vmem:[#allocation2 + $0x8] sm:$0xff]
    %v65 = vld [vmem:[#allocation5] sm:$0xff]
    %v66 = vld [vmem:[#allocation5 + $0x8] sm:$0xff]
    %v67 = vmul.f32 %v63, %v65
    %v68 = vmul.f32 %v64, %v66
    %v69 = vmul.f32 %v63, %v63
    %v70 = vmul.f32 %v64, %v64
    %v71 = vmul.f32 %v65, %v65
    %v72 = vmul.f32 %v66, %v66
    %v73 = vadd.f32 %v69, %v71
    %v74 = vadd.f32 %v70, %v72
    %v75 = vld [vmem:[#allocation7] sm:$0x1]
    %v76 = vld [vmem:[#allocation7 + $0x1] sm:$0x1]
    %v77 = vrot.slane %v67, 4
    %v78 = vadd.f32 %v67, %v77
    %v79 = vrot.slane %v78, 2
    %v80 = vadd.f32 %v78, %v79
    %v81 = vrot.slane %v80, 1
    %v82 = vadd.f32 %v80, %v81
    %v83 = vrot.slane %v68, 4
    %v84 = vadd.f32 %v68, %v83
    %v85 = vrot.slane %v84, 2
    %v86 = vadd.f32 %v84, %v85
    %v87 = vrot.slane %v86, 1
    %v88 = vadd.f32 %v86, %v87
    %v89 = vadd.f32 %v75, %v82
    %v90 = vadd.f32 %v76, %v88
    %91 = vst [vmem:[#allocation7] sm:$0x1] %v89
    %92 = vst [vmem:[#allocation7 + $0x1] sm:$0x1] %v90
    %v93 = vld [vmem:[#allocation8] sm:$0x1]
    %v94 = vld [vmem:[#allocation8 + $0x1] sm:$0x1]
    %v95 = vrot.slane %v73, 4
    %v96 = vadd.f32 %v73, %v95
    %v97 = vrot.slane %v96, 2
    %v98 = vadd.f32 %v96, %v97
    %v99 = vrot.slane %v98, 1
    %v100 = vadd.f32 %v98, %v99
    %v101 = vrot.slane %v74, 4
    %v102 = vadd.f32 %v74, %v101
    %v103 = vrot.slane %v102, 2
    %v104 = vadd.f32 %v102, %v103
    %v105 = vrot.slane %v104, 1
    %v106 = vadd.f32 %v104, %v105
    %v107 = vadd.f32 %v93, %v100
    %v108 = vadd.f32 %v94, %v106
    %109 = vst [vmem:[#allocation8] sm:$0x1] %v107
    %110 = vst [vmem:[#allocation8 + $0x1] sm:$0x1] %v108
    // Predicated region
    $region22: #{tpu_custom_call.1} parent=1 // pred_check
      _
    $region23: #{tpu_custom_call.1} parent=1 // pred_check_branch
      %112 = sbr.rel (0) target = $region25
    $region24: #{tpu_custom_call.1} parent=1 // pred_region
      %114 = vsyncadd [#allocation4], 0
      %s115 = sshll.u32 [#allocation7], 4
      %s116 = int_to_ptr.vmem [resolvable:$true] %s115
      %s117 = sshll.u32 %s2, 4
      %s118 = int_to_ptr.hbm [resolvable:$true] %s117
      %123 = dma.vmem_to_hbm [thread:$0]  %s116, 32, %s118, [#allocation4], 16, 16, 1
    $region25: #{tpu_custom_call.1} parent=1 // pred_fallthru
      _
    // Predicated region
    $region26: #{tpu_custom_call.1} parent=1 // pred_check
      _
    $region27: #{tpu_custom_call.1} parent=1 // pred_check_branch
      %125 = sbr.rel (0) target = $region29
    $region28: #{tpu_custom_call.1} parent=1 // pred_region
      %127 = vsyncadd [#allocation9], 0
      %s128 = sshll.u32 [#allocation8], 4
      %s129 = int_to_ptr.vmem [resolvable:$true] %s128
      %s130 = sshll.u32 %s3, 4
      %s131 = int_to_ptr.hbm [resolvable:$true] %s130
      %136 = dma.vmem_to_hbm [thread:$0]  %s129, 32, %s131, [#allocation9], 16, 16, 1
    $region29: #{tpu_custom_call.1} parent=1 // pred_fallthru
      _
    // Predicated region
    $region30: #{tpu_custom_call.1} parent=1 // pred_check
      _
    $region31: #{tpu_custom_call.1} parent=1 // pred_check_branch
      %138 = sbr.rel (0) target = $region33
    $region32: #{tpu_custom_call.1} parent=1 // pred_region
      %140 = dma.done [#allocation4], 32
    $region33: #{tpu_custom_call.1} parent=1 // pred_fallthru
      _
    // Predicated region
    $region34: #{tpu_custom_call.1} parent=1 // pred_check
      _
    $region35: #{tpu_custom_call.1} parent=1 // pred_check_branch
      %142 = sbr.rel (0) target = $region37
    $region36: #{tpu_custom_call.1} parent=1 // pred_region
      %144 = dma.done [#allocation9], 32
    $region37: #{tpu_custom_call.1} parent=1 // pred_fallthru
      _
    %145 = vsyncpa [#allocation3], 1
    %146 = vsyncpa [#allocation6], 1
    %147 = vsyncpa [#allocation4], 1
    %148 = vsyncpa [#allocation9], 1

</llo_original>
